<compile_context>
chip_gen: v7x
topology: tpu7x:2x2x1
jax: 0.10.0
libtpu: 0.0.40
codegen_flags: <defaults>
</compile_context>

<pallas_src>
import math

import jax
import jax.numpy as jnp
from jax.experimental import pallas as pl
from jax.experimental.pallas import tpu as pltpu


# ---------------------------------------------------------------------------
# Fused Linear + log_softmax kernel
# ---------------------------------------------------------------------------

def _generator_kernel(x_ref, wt_ref, b_ref, o_ref, logits_sc):
    """Grid = (row tiles, vocab tiles).
    x:(tm, Din) f32  wt:(Din, tv) bf16 (= W^T tile)  b:(1, tv) f32
    o:(tm, V)  logits_sc:(tm, V) f32 scratch holding the full logits row."""
    j = pl.program_id(1)
    tv = b_ref.shape[-1]

    # Partial logits for this vocab tile: bf16 inputs, f32 MXU accumulation.
    part = jnp.dot(x_ref[...].astype(jnp.bfloat16), wt_ref[...],
                   preferred_element_type=jnp.float32) + b_ref[...]
    start = pl.multiple_of(j * tv, tv)         # tv is 128-aligned (or == vocab)
    logits_sc[:, pl.ds(start, tv)] = part

    # Finalize on the last vocab step: stable log-softmax over the full row.
    @pl.when(j == pl.num_programs(1) - 1)
    def _():
        logits = logits_sc[...]
        mx = jnp.max(logits, axis=-1, keepdims=True)
        shifted = logits - mx
        lse = jnp.log(jnp.sum(jnp.exp(shifted), axis=-1, keepdims=True))
        o_ref[...] = (shifted - lse).astype(o_ref.dtype)


# ---------------------------------------------------------------------------
# VMEM / tile-size heuristics
# ---------------------------------------------------------------------------

def _vmem_budget_bytes():
    """Conservative per-kernel VMEM budget (headroom below the physical cap)."""
    cap = 64 * 1024 * 1024                     # smallest case (v7x per-core)
    try:
        cap = int(pltpu.get_tpu_info().vmem_capacity_bytes)
    except Exception:
        pass
    return int(cap * 7 // 8)                   # ~56 MiB v7x, ~112 MiB v5e/v6e


def _step_vmem_bytes(tm, d_model, vocab, tv, out_bytes):
    single_wt = (tv == vocab)
    x_b = 2 * tm * d_model * 4                          # double-buffered f32 x tile
    wt_b = (1 if single_wt else 2) * d_model * tv * 2   # bf16 W^T tile(s)
    b_b = (1 if single_wt else 2) * tv * 4              # f32 bias tile(s)
    out_b = 2 * tm * vocab * out_bytes                  # full-row output block
    sc_b = tm * vocab * 4                               # f32 logits scratch
    return x_b + wt_b + b_b + out_b + sc_b


def _pick_vocab_tile(d_model, vocab, budget):
    """Vocab tile: whole W^T if small, else the largest 256- (then 128-)aligned
    divisor whose double-buffered bf16 tile stays a small fraction of VMEM."""
    if d_model * vocab * 2 <= budget // 4 or vocab % 128 != 0:
        return vocab
    divs = [d for d in range(128, vocab, 128) if vocab % d == 0]
    divs.sort(key=lambda d: (d % 256 != 0, -d))   # prefer MXU-width-aligned, larger
    for tv in divs:
        if 2 * d_model * tv * 2 <= budget // 4:
            return tv
    return divs[-1] if divs else vocab


def _pick_row_tile(R, d_model, vocab, tv, budget, out_bytes):
    """Row tile: MXU-friendly, divides R, fits the VMEM budget; prefer >=2 grid
    steps at realistic sizes (v7x megacore), single step for tiny problems."""
    cands = [c for c in (1024, 512, 256, 128, 64, 32, 16, 8)
             if c < R and R % c == 0]
    if R >= 128:
        cands = cands + [R]          # >=2 row tiles preferred => both TCs busy
    else:
        cands = [R] + cands          # tiny problem: avoid per-step overhead
    for tm in cands:
        if _step_vmem_bytes(tm, d_model, vocab, tv, out_bytes) <= budget:
            return tm
    return cands[-1] if cands else R


# ---------------------------------------------------------------------------
# Wrapper
# ---------------------------------------------------------------------------

def generator_forward(x, wt, b, *, row_tile=None, vocab_tile=None):
    """x: (..., d_model) f32; wt: (d_model, vocab) = W^T, pre-transposed (and
    ideally pre-cast to bf16) once at setup; b: (vocab,) f32.
    Returns log_softmax(x @ W^T + b, axis=-1) in x.dtype."""
    *lead, d_model = x.shape
    vocab = wt.shape[1]
    R = 1
    for d in lead:
        R *= d
    x2d = x.reshape(R, d_model)
    b2 = b.reshape(1, vocab).astype(jnp.float32)
    wt = wt.astype(jnp.bfloat16)     # no-op when pre-cast at parameter setup

    budget = _vmem_budget_bytes()
    out_bytes = jnp.dtype(x.dtype).itemsize
    tv = vocab_tile if vocab_tile is not None else _pick_vocab_tile(d_model, vocab, budget)
    tm = row_tile if row_tile is not None else _pick_row_tile(R, d_model, vocab, tv, budget, out_bytes)

    n_row, n_voc = R // tm, vocab // tv
    grid = (n_row, n_voc)

    if n_voc == 1:
        # Grid-invariant operands: a second pipeline buffer is pure waste.
        wt_spec = pl.BlockSpec((d_model, tv), lambda i, j: (0, j),
                               pipeline_mode=pl.Buffered(1))
        b_spec = pl.BlockSpec((1, tv), lambda i, j: (0, j),
                              pipeline_mode=pl.Buffered(1))
    else:
        wt_spec = pl.BlockSpec((d_model, tv), lambda i, j: (0, j))
        b_spec = pl.BlockSpec((1, tv), lambda i, j: (0, j))

    vmem_limit = int(min(128 * 1024 * 1024,
                         max(32 * 1024 * 1024,
                             _step_vmem_bytes(tm, d_model, vocab, tv, out_bytes)
                             + (8 << 20))))

    out = pl.pallas_call(
        _generator_kernel,
        out_shape=jax.ShapeDtypeStruct((R, vocab), x.dtype),
        grid=grid,
        in_specs=[
            pl.BlockSpec((tm, d_model), lambda i, j: (i, 0)),  # x row tile (resident over j)
            wt_spec,                                           # bf16 W^T vocab tile
            b_spec,                                            # bias vocab tile
        ],
        # Full-vocab output block, revisited across the vocab axis and written
        # once on the last vocab step -> lane-dense, unmasked stores.
        out_specs=pl.BlockSpec((tm, vocab), lambda i, j: (i, 0)),
        scratch_shapes=[pltpu.VMEM((tm, vocab), jnp.float32)],
        compiler_params=pltpu.CompilerParams(
            dimension_semantics=("parallel", "arbitrary"),
            vmem_limit_bytes=vmem_limit,
        ),
    )(x2d, wt, b2)
    return out.reshape(*lead, vocab)


# ---------------------------------------------------------------------------
# Pure-JAX reference (mirrors the PyTorch forward) and param setup
# ---------------------------------------------------------------------------

def reference_generator(x, w, b):
    return jax.nn.log_softmax(x @ w.T + b, axis=-1)


def _init_params(key, d_model, vocab):
    k_w, k_b = jax.random.split(key)
    bound = 1.0 / math.sqrt(d_model)          # nn.Linear default init
    w = jax.random.uniform(k_w, (vocab, d_model), minval=-bound, maxval=bound,
                           dtype=jnp.float32)
    b = jax.random.uniform(k_b, (vocab,), minval=-bound, maxval=bound,
                           dtype=jnp.float32)
    # Pre-transpose and pre-cast ONCE, outside the forward hot path.
    wt_bf16 = jnp.transpose(w).astype(jnp.bfloat16)   # (d_model, vocab)
    return w, b, wt_bf16


# ---------------------------------------------------------------------------
# Main
# ---------------------------------------------------------------------------

if __name__ == "__main__":
    k1, k2, k3, k4 = jax.random.split(jax.random.PRNGKey(0), 4)

    # Case 1: toy module shape — single row/vocab tile, Buffered(1) resident W^T.
    B, S, d_model, vocab = 2, 8, 32, 128
    x = jax.random.normal(k1, (B, S, d_model), dtype=jnp.float32)
    w, b, wt_bf16 = _init_params(k2, d_model, vocab)

    out = jax.block_until_ready(generator_forward(x, wt_bf16, b))
    ref = reference_generator(x, w, b)
    assert out.shape == (B, S, vocab)
    # bf16 matmul inputs (f32 accumulation) -> tolerance loosened vs f32 reference.
    assert jnp.allclose(out, ref, atol=3e-2, rtol=3e-2), "case 1 mismatch vs reference"
    assert jnp.allclose(jnp.exp(out).sum(-1), 1.0, atol=1e-3), "case 1 not normalized"

    # Case 2: exercise the tiled path (4 row tiles x 2 vocab tiles, scratch finalize).
    B2, S2, d_model2, vocab2 = 2, 64, 64, 512
    x2 = jax.random.normal(k3, (B2, S2, d_model2), dtype=jnp.float32)
    w2, b2, wt2_bf16 = _init_params(k4, d_model2, vocab2)
    out2 = jax.block_until_ready(
        generator_forward(x2, wt2_bf16, b2, row_tile=32, vocab_tile=256))
    ref2 = reference_generator(x2, w2, b2)
    assert out2.shape == (B2, S2, vocab2)
    assert jnp.allclose(out2, ref2, atol=3e-2, rtol=3e-2), "case 2 mismatch vs reference"
    assert jnp.allclose(jnp.exp(out2).sum(-1), 1.0, atol=1e-3), "case 2 not normalized"

    print("KERNEL_OK")
</pallas_src>

<mosaic_0001>
module attributes {stable_mosaic.version = 11 : i64} {
  func.func @_generator_kernel(%arg0: i32, %arg1: i32, %arg2: memref<16x32xf32, #tpu.memory_space<vmem>>, %arg3: memref<32x128xbf16, #tpu.memory_space<vmem>>, %arg4: memref<1x128xf32, #tpu.memory_space<vmem>>, %arg5: memref<16x128xf32, #tpu.memory_space<vmem>>, %arg6: memref<16x128xf32, #tpu.memory_space<vmem>>) attributes {dimension_semantics = [#tpu.dimension_semantics<parallel>, #tpu.dimension_semantics<arbitrary>], iteration_bounds = array<i64: 1, 1>, scalar_prefetch = 0 : i64, scratch_operands = 1 : i64, tpu.core_type = #tpu.core_type<tc>, window_params = [{transform_indices = @transform_0, window_bounds = array<i64: 16, 32>}, {pipeline_mode = #tpu.pipeline_mode<synchronous>, transform_indices = @transform_1, window_bounds = array<i64: 32, 128>}, {pipeline_mode = #tpu.pipeline_mode<synchronous>, transform_indices = @transform_2, window_bounds = array<i64: 1, 128>}, {transform_indices = @transform_3, window_bounds = array<i64: 16, 128>}]} {
    %c0 = arith.constant 0 : index
    %c0_0 = arith.constant 0 : index
    %0 = vector.load %arg2[%c0, %c0_0] : memref<16x32xf32, #tpu.memory_space<vmem>>, vector<16x32xf32>
    %1 = arith.truncf %0 : vector<16x32xf32> to vector<16x32xbf16>
    %c0_1 = arith.constant 0 : index
    %c0_2 = arith.constant 0 : index
    %2 = vector.load %arg3[%c0_1, %c0_2] : memref<32x128xbf16, #tpu.memory_space<vmem>>, vector<32x128xbf16>
    %cst = arith.constant dense<0.000000e+00> : vector<16x128xf32>
    %3 = tpu.matmul %1, %2, %cst {dimension_numbers = #tpu.dot_dimension_numbers<[1], [0], [0], [1], [0, 0, 1, 1], [], []>} : vector<16x32xbf16>, vector<32x128xbf16>, vector<16x128xf32> -> vector<16x128xf32>
    %c0_3 = arith.constant 0 : index
    %c0_4 = arith.constant 0 : index
    %4 = vector.load %arg4[%c0_3, %c0_4] : memref<1x128xf32, #tpu.memory_space<vmem>>, vector<1x128xf32>
    %5 = vector.broadcast %4 : vector<1x128xf32> to vector<16x128xf32>
    %6 = arith.addf %3, %5 : vector<16x128xf32>
    %c128_i32 = arith.constant 128 : i32
    %7 = arith.muli %arg1, %c128_i32 : i32
    %8 = tpu.assume_multiple %7, 128 : i32
    %c0_5 = arith.constant 0 : index
    %9 = arith.index_cast %8 : i32 to index
    %10 = vector.load %arg6[%c0_5, %9] : memref<16x128xf32, #tpu.memory_space<vmem>>, vector<16x128xf32>
    tpu.vector_store %arg6[%c0_5, %9], %6 {strides = array<i32>} : memref<16x128xf32, #tpu.memory_space<vmem>>, vector<16x128xf32>,
    %c0_i32 = arith.constant 0 : i32
    %11 = arith.cmpi eq, %arg1, %c0_i32 : i32
    %12 = arith.extui %11 : i1 to i32
    %c0_i32_6 = arith.constant 0 : i32
    %13 = arith.cmpi ne, %12, %c0_i32_6 : i32
    scf.if %13 {
      %c0_7 = arith.constant 0 : index
      %c0_8 = arith.constant 0 : index
      %14 = vector.load %arg6[%c0_7, %c0_8] : memref<16x128xf32, #tpu.memory_space<vmem>>, vector<16x128xf32>
      %cst_9 = arith.constant dense<0xFF800000> : vector<16xf32>
      %15 = vector.multi_reduction <maximumf>, %14, %cst_9 [1] : vector<16x128xf32> to vector<16xf32>
      %16 = vector.shape_cast %15 : vector<16xf32> to vector<16x1xf32>
      %17 = vector.broadcast %16 : vector<16x1xf32> to vector<16x128xf32>
      %18 = arith.subf %14, %17 : vector<16x128xf32>
      %19 = math.exp %18 : vector<16x128xf32>
      %cst_10 = arith.constant dense<0.000000e+00> : vector<16xf32>
      %20 = vector.multi_reduction <add>, %19, %cst_10 [1] : vector<16x128xf32> to vector<16xf32>
      %21 = vector.shape_cast %20 : vector<16xf32> to vector<16x1xf32>
      %22 = math.log %21 : vector<16x1xf32>
      %23 = vector.broadcast %22 : vector<16x1xf32> to vector<16x128xf32>
      %24 = arith.subf %18, %23 : vector<16x128xf32>
      %c0_11 = arith.constant 0 : index
      %c0_12 = arith.constant 0 : index
      %25 = vector.load %arg5[%c0_11, %c0_12] : memref<16x128xf32, #tpu.memory_space<vmem>>, vector<16x128xf32>
      tpu.vector_store %arg5[%c0_11, %c0_12], %24 {strides = array<i32>} : memref<16x128xf32, #tpu.memory_space<vmem>>, vector<16x128xf32>,
    } else {
    }
    return
  }
  func.func @transform_0(%arg0: i32, %arg1: i32) -> (i32, i32) {
    %c0_i32 = arith.constant 0 : i32
    %c0_i32_0 = arith.constant 0 : i32
    return %arg0, %c0_i32 : i32, i32
  }
  func.func @transform_1(%arg0: i32, %arg1: i32) -> (i32, i32) {
    %c0_i32 = arith.constant 0 : i32
    %c0_i32_0 = arith.constant 0 : i32
    return %c0_i32, %arg1 : i32, i32
  }
  func.func @transform_2(%arg0: i32, %arg1: i32) -> (i32, i32) {
    %c0_i32 = arith.constant 0 : i32
    %c0_i32_0 = arith.constant 0 : i32
    return %c0_i32, %arg1 : i32, i32
  }
  func.func @transform_3(%arg0: i32, %arg1: i32) -> (i32, i32) {
    %c0_i32 = arith.constant 0 : i32
    %c0_i32_0 = arith.constant 0 : i32
    return %arg0, %c0_i32 : i32, i32
  }
}

</mosaic_0001>

<llo_original>
// kernel: tpu_custom_call.1
$region0: #{tpu_custom_call.1}
  #allocation0 [shape = 'u32[]', space=smem, size = 0x4, offset = 0x4, fixed_abs, tag = 'smem constant byte address 0x4 - core index']
  #allocation1 [shape = 'u32[144,128]{1,0:T(1,128)}', space=vmem, size = 0x12000, scoped, tag = 'internal scratch']
  #allocation2 [shape = 'f32[16,128]{1,0:T(8,128)}', space=vmem, size = 0x2000, scoped, tag = 'scratch operand']
  %s0 = inlined_call_operand.hbm [shape: f32[16,32], index: 0, kind: input, shape index: {}]
  %s1 = inlined_call_operand.hbm [shape: bf16[32,128], index: 1, kind: input, shape index: {}]
  %s2 = inlined_call_operand.vmem [shape: f32[1,128], index: 2, kind: input, shape index: {}]
  %s3 = inlined_call_operand.hbm [shape: f32[16,128], index: 3, kind: output, shape index: {}]
  %s4 = sld [smem:[#allocation0]]
  $region34: #{tpu_custom_call.1} parent=0
    _
  %s6 = ssub.s32 1, %s4
  %s7 = scalar_select 0, %s6, %s4
  $region1: #{tpu_custom_call.1} parent=0
    #allocation3 [shape = 'u8[8192]{0}', space=vmem, size = 0x2000, scoped, tag = 'input window, operand 0, single buffered']
    #allocation4 [shape = 's32[1]{0}', space=sflag, size = 0x4, scoped, tag = 'scoped memory for tpu_custom_call.1']
    #allocation5 [shape = 's32[1]{0}', space=sflag, size = 0x4, scoped, tag = 'scoped memory for tpu_custom_call.1']
    #allocation6 [shape = 'u8[8192]{0}', space=vmem, size = 0x2000, scoped, tag = 'input window, operand 1, single buffered']
    #allocation7 [shape = 's32[1]{0}', space=sflag, size = 0x4, scoped, tag = 'scoped memory for tpu_custom_call.1']
    #allocation8 [shape = 'u8[8192]{0}', space=vmem, size = 0x2000, scoped, tag = 'output window, operand 0, single buffered']
    %8 = vsyncpa [#allocation4], 0
    %9 = vsyncpa [#allocation7], 0
    %10 = vsyncpa [#allocation5], 0
    // Predicated region
    $region2: #{tpu_custom_call.1} parent=1 // pred_check
      _
    $region3: #{tpu_custom_call.1} parent=1 // pred_check_branch
      %12 = sbr.rel (0) target = $region5
    $region4: #{tpu_custom_call.1} parent=1 // pred_region
      %s14 = ssub.s32 256, 256
      %15 = vsyncadd [#allocation4], %s14
      %s16 = sshll.u32 [#allocation3], 4
      %s17 = int_to_ptr.vmem [resolvable:$true] %s16
      %22 = dma.hbm_to_vmem [thread:$0]  %s0, 256, %s17, [#allocation4], 128, 128, 8
    $region5: #{tpu_custom_call.1} parent=1 // pred_fallthru
      _
    // Predicated region
    $region6: #{tpu_custom_call.1} parent=1 // pred_check
      _
    $region7: #{tpu_custom_call.1} parent=1 // pred_check_branch
      %24 = sbr.rel (0) target = $region9
    $region8: #{tpu_custom_call.1} parent=1 // pred_region
      %s26 = ssub.s32 256, 256
      %27 = vsyncadd [#allocation7], %s26
      %s28 = sshll.u32 [#allocation6], 4
      %s29 = int_to_ptr.vmem [resolvable:$true] %s28
      %34 = dma.hbm_to_vmem [thread:$0]  %s1, 256, %s29, [#allocation7], 64, 64, 4
    $region9: #{tpu_custom_call.1} parent=1 // pred_fallthru
      _
    // Predicated region
    $region10: #{tpu_custom_call.1} parent=1 // pred_check
      _
    $region11: #{tpu_custom_call.1} parent=1 // pred_check_branch
      %36 = sbr.rel (0) target = $region13
    $region12: #{tpu_custom_call.1} parent=1 // pred_region
      _
    $region13: #{tpu_custom_call.1} parent=1 // pred_fallthru
      _
    // Predicated region
    $region14: #{tpu_custom_call.1} parent=1 // pred_check
      _
    $region15: #{tpu_custom_call.1} parent=1 // pred_check_branch
      %38 = sbr.rel (0) target = $region17
    $region16: #{tpu_custom_call.1} parent=1 // pred_region
      %39 = dma.done [#allocation4], 256
    $region17: #{tpu_custom_call.1} parent=1 // pred_fallthru
      _
    // Predicated region
    $region18: #{tpu_custom_call.1} parent=1 // pred_check
      _
    $region19: #{tpu_custom_call.1} parent=1 // pred_check_branch
      %41 = sbr.rel (0) target = $region21
    $region20: #{tpu_custom_call.1} parent=1 // pred_region
      %42 = dma.done [#allocation7], 256
    $region21: #{tpu_custom_call.1} parent=1 // pred_fallthru
      _
    %v44 = vld [vmem:[#allocation3] sm:$0xff]
    %v45 = vld [vmem:[#allocation3 + $0x8] sm:$0xff]
    %v46 = vpack.c.bf16 %v45, %v44
    %v47 = vld [vmem:[#allocation6] sm:$0xf]
    %v48 = vld [vmem:[#allocation6 + $0x4] sm:$0xf]
    %v49 = vld [vmem:[#allocation6 + $0x8] sm:$0xf]
    %v50 = vld [vmem:[#allocation6 + $0xc] sm:$0xf]
    %v51 = vld [vmem:[%s2] sm:$0x1]
    %v53 = vlaneseq
    %v54 = vshrl.u32 %v53, 7
    %v55 = vsub.s32 0, %v54
    %v56 = vrot.slane %v51, %v55
    %v62 = vunpack.c.l.b16 %v47
    %v63 = vunpack.c.l.b16 %v48
    %v64 = vunpack.c.l.b16 %v49
    %v65 = vunpack.c.l.b16 %v50
    %v66 = vpack.c.b16 %v63, %v62
    %v67 = vpack.c.b16 %v65, %v64
    %vm70 = vcmask 261120
    %v72 = vsel %vm70, %v46, 0
    %74 = vmatprep.subr.bf16.mxu0 0
    %75 = vmatpush1.bf16.msra.mxu0 %v66
    %76 = vmatprep.subr.bf16.mxu0 0
    %77 = vmatpush1.bf16.msra.mxu0 %v67
    %78 = vmatprep.subr.bf16.mxu0 0
    %79 = vmatpush1.bf16.msra.mxu0 0
    %80 = vmatprep.subr.bf16.mxu0 0
    %81 = vmatpush1.bf16.msra.mxu0 0
    %82 = vmatprep.subr.bf16.mxu0 0
    %83 = vmatpush1.bf16.msra.mxu0 0
    %84 = vmatprep.subr.bf16.mxu0 0
    %85 = vmatpush1.bf16.msra.mxu0 0
    %86 = vmatprep.subr.bf16.mxu0 0
    %87 = vmatpush1.bf16.msra.mxu0 0
    %88 = vmatprep.subr.bf16.mxu0 0
    %89 = vmatpush1.bf16.msra.mxu0 0
    %90 = vmatprep.subr.bf16.mxu0 0
    %91 = vmatpush1.bf16.msra.mxu0 0
    %92 = vmatprep.subr.bf16.mxu0 0
    %93 = vmatpush1.bf16.msra.mxu0 0
    %94 = vmatprep.subr.bf16.mxu0 0
    %95 = vmatpush1.bf16.msra.mxu0 0
    %96 = vmatprep.subr.bf16.mxu0 0
    %97 = vmatpush1.bf16.msra.mxu0 0
    %98 = vmatprep.subr.bf16.mxu0 0
    %99 = vmatpush1.bf16.msra.mxu0 0
    %100 = vmatprep.subr.bf16.mxu0 0
    %101 = vmatpush1.bf16.msra.mxu0 0
    %102 = vmatprep.subr.bf16.mxu0 0
    %103 = vmatpush1.bf16.msra.mxu0 0
    %104 = vmatprep.subr.bf16.mxu0 0
    %105 = vmatpush1.bf16.msra.mxu0 0
    %106 = vmatprep.mubr.bf16.mxu0 0
    %107 = vmatmul.mubr.bf16.gmra.mrb[0].mxu0 %v72
    %v108 = vpop.f32.mrb[0].mxu0
    %v109 = vadd.f32 %v56, %v108
    %v110 = vpop.f32.mrb[0].mxu0
    %v111 = vpop.f32.mrb[0].mxu0
    %v112 = vadd.f32 %v56, %v111
    %v113 = vpop.f32.mrb[0].mxu0
    %114 = vdwg.mxu0
    %s115 = smul.u32 0, 128
    %s116 = sshra.s32 %s115, 7
    %s117 = sand.u32 %s115, 127
    %s118 = scalar_lea.vmem [#allocation2], %s116
    %119 = vst [vmem:[%s118] sm:$0xff] %v109
    %120 = vst [vmem:[%s118 + $0x8] sm:$0xff] %v112
    %p121 = scmp.eq.s32.totalorder 0, 0
    // Predicated region
    $region22: #{tpu_custom_call.1} parent=1 // pred_check
      %p122 = pneg %p121
    $region23: #{tpu_custom_call.1} parent=1 // pred_check_branch
      %124 = sbr.rel (%p122) target = $region25
    $region24: #{tpu_custom_call.1} parent=1 // pred_region
      %v125 = vld [vmem:[#allocation2] sm:$0xff]
      %v126 = vld [vmem:[#allocation2 + $0x8] sm:$0xff]
      %127 = vmax.xlane.f32.xlu0 %v125
      %v128 = vpop.xlane.xlu0 %127
      %129 = vmax.xlane.f32.xlu0 %v126
      %v130 = vpop.xlane.xlu0 %129
      %v131 = vsub.f32 %v125, %v128
      %v132 = vsub.f32 %v126, %v130
      %v133 = vmul.f32 %v131, 1.442695
      %v134 = vpow.pop %v133
      %v135 = vmul.f32 %v132, 1.442695
      %v136 = vpow.pop %v135
      %137 = vadd.xlane.f32.xlu0 %v134
      %v138 = vpop.xlane.xlu0 %137
      %139 = vadd.xlane.f32.xlu0 %v136
      %v140 = vpop.xlane.xlu0 %139
      %v141 = vlog2.pop %v138
      %v142 = vmul.f32 %v141, 0.6931472
      %v143 = vlog2.pop %v140
      %v144 = vmul.f32 %v143, 0.6931472
      %v145 = vsub.f32 %v131, %v142
      %v146 = vsub.f32 %v132, %v144
      %147 = vst [vmem:[#allocation8] sm:$0xff] %v145
      %148 = vst [vmem:[#allocation8 + $0x8] sm:$0xff] %v146
    $region25: #{tpu_custom_call.1} parent=1 // pred_fallthru
      _
    // Predicated region
    $region26: #{tpu_custom_call.1} parent=1 // pred_check
      _
    $region27: #{tpu_custom_call.1} parent=1 // pred_check_branch
      %150 = sbr.rel (0) target = $region29
    $region28: #{tpu_custom_call.1} parent=1 // pred_region
      %s152 = ssub.s32 256, 256
      %153 = vsyncadd [#allocation5], %s152
      %s154 = sshll.u32 [#allocation8], 4
      %s155 = int_to_ptr.vmem [resolvable:$true] %s154
      %160 = dma.vmem_to_hbm [thread:$0]  %s155, 256, %s3, [#allocation5], 128, 128, 8
    $region29: #{tpu_custom_call.1} parent=1 // pred_fallthru
      _
    // Predicated region
    $region30: #{tpu_custom_call.1} parent=1 // pred_check
      _
    $region31: #{tpu_custom_call.1} parent=1 // pred_check_branch
      %162 = sbr.rel (0) target = $region33
    $region32: #{tpu_custom_call.1} parent=1 // pred_region
      %163 = dma.done [#allocation5], 256
    $region33: #{tpu_custom_call.1} parent=1 // pred_fallthru
      _
    %164 = vsyncpa [#allocation4], 1
    %165 = vsyncpa [#allocation7], 1
    %166 = vsyncpa [#allocation5], 1

</llo_original>
